<compile_context>
chip_gen: v7x
topology: tpu7x:2x2x1
jax: 0.10.0
libtpu: 0.0.40
codegen_flags: <defaults>
</compile_context>

<pallas_src>
from functools import partial

import jax
import jax.numpy as jnp
from jax.experimental import pallas as pl
from jax.experimental.pallas import tpu as pltpu

_NEG_FILL = -9999999.0


def _round_up(n, m):
    return ((n + m - 1) // m) * m


def _madqn_kernel(x_ref, h0_ref,
                  w1_ref, b1_ref, w2_ref, b2_ref,
                  wx_ref, bx_ref, wh_ref, bh_ref,
                  wq_ref, bq_ref, wo_ref, bo_ref,
                  logit_ref, nexth_ref):
    """One row tile of the QMix(mixer=False, gru, single_step=True) forward."""
    f32 = jnp.float32
    bf16 = jnp.bfloat16

    def mm(v_bf, w_ref, b_ref):
        # bf16 MXU operands, f32 accumulation, f32 bias add.
        return jnp.dot(v_bf, w_ref[...], preferred_element_type=f32) + b_ref[...]

    x = x_ref[...]                                   # (TN, OBS) bf16
    hprev_bf = h0_ref[...]                           # (TN, H)   bf16 (matmul operand)
    hprev = hprev_bf.astype(f32)                     # f32 copy for elementwise GRU math

    # --- FCEncoder: Linear+ReLU, Linear+ReLU ---
    h = jnp.maximum(mm(x, w1_ref, b1_ref), 0.0)
    h = jnp.maximum(mm(h.astype(bf16), w2_ref, b2_ref), 0.0)
    h_bf = h.astype(bf16)                            # hoisted cast

    # --- GRU cell (single timestep), fused r|z|n gate matmuls ---
    gx = mm(h_bf, wx_ref, bx_ref)                    # (TN, 3H) f32
    gh = mm(hprev_bf, wh_ref, bh_ref)                # (TN, 3H) f32
    H = hprev.shape[-1]
    r = jax.nn.sigmoid(gx[:, 0 * H:1 * H] + gh[:, 0 * H:1 * H])
    z = jax.nn.sigmoid(gx[:, 1 * H:2 * H] + gh[:, 1 * H:2 * H])
    n = jnp.tanh(gx[:, 2 * H:3 * H] + r * gh[:, 2 * H:3 * H])
    hnew = (1.0 - z) * n + z * hprev
    nexth_ref[...] = hnew.astype(nexth_ref.dtype)

    # --- DiscreteHead: Linear+ReLU, Linear (mask fill happens in the wrapper) ---
    q = jnp.maximum(mm(hnew.astype(bf16), wq_ref, bq_ref), 0.0)
    logit_ref[...] = mm(q.astype(bf16), wo_ref, bo_ref).astype(logit_ref.dtype)


def pack_params(params):
    """One-time host-side packing: bf16 weights at true shapes, fused GRU gates,
    f32 (1, width) biases.  Call once and reuse across forward calls."""
    bf16, f32 = jnp.bfloat16, jnp.float32

    def b2d(b):
        return b.reshape(1, -1).astype(f32)

    return {
        'w1': params['w1'].astype(bf16), 'b1': b2d(params['b1']),
        'w2': params['w2'].astype(bf16), 'b2': b2d(params['b2']),
        'wx': jnp.concatenate([params['wxr'], params['wxz'], params['wxn']],
                              axis=1).astype(bf16),
        'bx': jnp.concatenate([params['bxr'], params['bxz'], params['bxn']]
                              ).reshape(1, -1).astype(f32),
        'wh': jnp.concatenate([params['whr'], params['whz'], params['whn']],
                              axis=1).astype(bf16),
        'bh': jnp.concatenate([params['bhr'], params['bhz'], params['bhn']]
                              ).reshape(1, -1).astype(f32),
        'wq': params['wq'].astype(bf16), 'bq': b2d(params['bq']),
        'wo': params['wo'].astype(bf16), 'bo': b2d(params['bo']),
    }


def _choose_row_tiling(n_rows, row_block):
    """Row tile size / padded row count.  16-row quantum (bf16 sublane packing);
    prefer >= 2 blocks so the 'parallel' axis shards across v7x's 2 TensorCores."""
    rowq = 16
    rows_q = _round_up(n_rows, rowq)
    tn = min(_round_up(row_block, rowq), max(rowq, _round_up(rows_q // 2, rowq)))
    n_pad = _round_up(rows_q, tn)
    return tn, n_pad


@partial(jax.jit,
         static_argnames=('batch', 'agents', 'action_shape', 'hidden', 'row_block'))
def madqn_forward(packed, agent_state, action_mask, prev_state,
                  *, batch, agents, action_shape, hidden, row_block=1024):
    """MADQN / QMix(current, mixer=False) forward pass in one Pallas call."""
    n_rows = batch * agents
    obs = agent_state.shape[-1]
    tn, n_pad = _choose_row_tiling(n_rows, row_block)

    def rows(a, cols):
        # Row padding only (true lane width kept); fused into this jit by XLA.
        a = a.reshape(n_rows, cols).astype(jnp.bfloat16)
        if n_pad != n_rows:
            a = jnp.pad(a, ((0, n_pad - n_rows), (0, 0)))
        return a

    x = rows(agent_state, obs)
    h0 = rows(prev_state, hidden)

    def row_spec(cols):
        return pl.BlockSpec((tn, cols), lambda i: (i, 0))

    def full_spec(arr):
        shape = arr.shape
        return pl.BlockSpec(shape, lambda i: (0,) * len(shape))   # resident

    p = packed
    weight_args = (p['w1'], p['b1'], p['w2'], p['b2'], p['wx'], p['bx'],
                   p['wh'], p['bh'], p['wq'], p['bq'], p['wo'], p['bo'])

    logit_p, nexth_p = pl.pallas_call(
        _madqn_kernel,
        out_shape=(
            jax.ShapeDtypeStruct((n_pad, action_shape), jnp.bfloat16),
            jax.ShapeDtypeStruct((n_pad, hidden), jnp.bfloat16),
        ),
        grid=(n_pad // tn,),
        in_specs=[row_spec(obs), row_spec(hidden)]
                 + [full_spec(w) for w in weight_args],
        out_specs=[row_spec(action_shape), row_spec(hidden)],
        compiler_params=pltpu.CompilerParams(
            dimension_semantics=("parallel",),
        ),
    )(x, h0, *weight_args)

    logit = logit_p[:n_rows].astype(jnp.float32)
    nexth = nexth_p[:n_rows].astype(jnp.float32)

    # Mask fill + max + agent-sum: trivially fused elementwise/reduce in XLA.
    mask = action_mask.reshape(n_rows, action_shape).astype(jnp.float32)
    logit = jnp.where(mask == 0.0, _NEG_FILL, logit)
    q_act = jnp.max(logit, axis=-1)
    total_q = q_act.reshape(batch, agents).sum(axis=-1)

    return {
        'total_q': total_q,                                        # (B,)
        'logit': logit.reshape(batch, agents, action_shape),       # masked agent_q
        'next_state': nexth.reshape(batch, agents, hidden),
        'action_mask': action_mask,
    }


def _reference(params, agent_state, action_mask, prev_state,
               *, batch, agents, action_shape, hidden):
    """Pure-JAX f32 reference for correctness checking."""
    n_rows = batch * agents
    x = agent_state.reshape(n_rows, -1).astype(jnp.float32)
    h0 = prev_state.reshape(n_rows, hidden).astype(jnp.float32)
    mask = action_mask.reshape(n_rows, action_shape).astype(jnp.float32)
    p = params

    h = jnp.maximum(x @ p['w1'] + p['b1'], 0.0)
    h = jnp.maximum(h @ p['w2'] + p['b2'], 0.0)
    r = jax.nn.sigmoid(h @ p['wxr'] + p['bxr'] + h0 @ p['whr'] + p['bhr'])
    z = jax.nn.sigmoid(h @ p['wxz'] + p['bxz'] + h0 @ p['whz'] + p['bhz'])
    n = jnp.tanh(h @ p['wxn'] + p['bxn'] + r * (h0 @ p['whn'] + p['bhn']))
    hnew = (1.0 - z) * n + z * h0
    q = jnp.maximum(hnew @ p['wq'] + p['bq'], 0.0)
    logit = q @ p['wo'] + p['bo']
    logit = jnp.where(mask == 0.0, _NEG_FILL, logit)
    q_act = jnp.max(logit, axis=-1)
    total_q = q_act.reshape(batch, agents).sum(-1)
    return (total_q,
            logit.reshape(batch, agents, action_shape),
            hnew.reshape(batch, agents, hidden))


def init_params(key, obs_shape, hidden_size_list, action_shape):
    h0_size, h1_size = hidden_size_list
    hidden = h1_size

    def lin(k, fan_in, fan_out, bound):
        kw, kb = jax.random.split(k)
        w = jax.random.uniform(kw, (fan_in, fan_out), jnp.float32, -bound, bound)
        b = jax.random.uniform(kb, (fan_out,), jnp.float32, -bound, bound)
        return w, b

    keys = jax.random.split(key, 10)
    p = {}
    p['w1'], p['b1'] = lin(keys[0], obs_shape, h0_size, 1.0 / obs_shape ** 0.5)  # FCEncoder.init
    p['w2'], p['b2'] = lin(keys[1], h0_size, h1_size, 1.0 / h0_size ** 0.5)      # FCEncoder.main
    gb = 1.0 / hidden ** 0.5                                                     # nn.GRUCell init
    p['wxr'], p['bxr'] = lin(keys[2], h1_size, hidden, gb)
    p['wxz'], p['bxz'] = lin(keys[3], h1_size, hidden, gb)
    p['wxn'], p['bxn'] = lin(keys[4], h1_size, hidden, gb)
    p['whr'], p['bhr'] = lin(keys[5], hidden, hidden, gb)
    p['whz'], p['bhz'] = lin(keys[6], hidden, hidden, gb)
    p['whn'], p['bhn'] = lin(keys[7], hidden, hidden, gb)
    p['wq'], p['bq'] = lin(keys[8], hidden, hidden, 1.0 / hidden ** 0.5)         # DiscreteHead MLP
    p['wo'], p['bo'] = lin(keys[9], hidden, action_shape, 1.0 / hidden ** 0.5)   # DiscreteHead out
    return p


if __name__ == "__main__":
    # Small, forward-consistent shapes.
    B, A = 2, 4                     # batch, agent_num
    OBS = 16                        # obs_shape
    GOBS = 24                       # global_obs_shape (unused: cooperation=False, mixer=False)
    ACT = 8                         # action_shape
    HIDDEN_LIST = [32, 32]          # hidden_size_list
    HID = HIDDEN_LIST[-1]

    key = jax.random.PRNGKey(0)
    k_par, k_obs, k_gobs, k_h0, k_mask = jax.random.split(key, 5)

    params = init_params(k_par, OBS, HIDDEN_LIST, ACT)
    packed = pack_params(params)     # one-time packing; reuse across forward calls

    agent_state = jax.random.normal(k_obs, (B, A, OBS), jnp.float32)
    global_state = jax.random.normal(k_gobs, (B, A, GOBS), jnp.float32)  # carried, unused (no mixer)
    prev_state = jax.random.normal(k_h0, (B, A, HID), jnp.float32)       # GRU hidden per (batch, agent)
    action_mask = (jax.random.uniform(k_mask, (B, A, ACT)) > 0.3).astype(jnp.float32)

    out = madqn_forward(packed, agent_state, action_mask, prev_state,
                        batch=B, agents=A, action_shape=ACT, hidden=HID)
    jax.block_until_ready(out)

    ref_totq, ref_logit, ref_next = _reference(
        params, agent_state, action_mask, prev_state,
        batch=B, agents=A, action_shape=ACT, hidden=HID)

    assert out['total_q'].shape == (B,)
    assert out['logit'].shape == (B, A, ACT)
    assert out['next_state'].shape == (B, A, HID)
    # Tolerances loosened vs. pure-f32: matmul operands AND streamed
    # activations/outputs are bf16 (all accumulation / gate math stays f32).
    assert jnp.allclose(out['total_q'], ref_totq, rtol=5e-2, atol=1e-1)
    assert jnp.allclose(out['logit'], ref_logit, rtol=5e-2, atol=1e-1)
    assert jnp.allclose(out['next_state'], ref_next, rtol=5e-2, atol=1e-1)

    print("KERNEL_OK")
</pallas_src>

<mosaic_0001>
module attributes {stable_mosaic.version = 11 : i64} {
  func.func @_madqn_kernel(%arg0: i32, %arg1: memref<16x16xbf16, #tpu.memory_space<vmem>>, %arg2: memref<16x32xbf16, #tpu.memory_space<vmem>>, %arg3: memref<16x32xbf16, #tpu.memory_space<vmem>>, %arg4: memref<1x32xf32, #tpu.memory_space<vmem>>, %arg5: memref<32x32xbf16, #tpu.memory_space<vmem>>, %arg6: memref<1x32xf32, #tpu.memory_space<vmem>>, %arg7: memref<32x96xbf16, #tpu.memory_space<vmem>>, %arg8: memref<1x96xf32, #tpu.memory_space<vmem>>, %arg9: memref<32x96xbf16, #tpu.memory_space<vmem>>, %arg10: memref<1x96xf32, #tpu.memory_space<vmem>>, %arg11: memref<32x32xbf16, #tpu.memory_space<vmem>>, %arg12: memref<1x32xf32, #tpu.memory_space<vmem>>, %arg13: memref<32x8xbf16, #tpu.memory_space<vmem>>, %arg14: memref<1x8xf32, #tpu.memory_space<vmem>>, %arg15: memref<16x8xbf16, #tpu.memory_space<vmem>>, %arg16: memref<16x32xbf16, #tpu.memory_space<vmem>>) attributes {dimension_semantics = [#tpu.dimension_semantics<parallel>], iteration_bounds = array<i64: 1>, scalar_prefetch = 0 : i64, scratch_operands = 0 : i64, tpu.core_type = #tpu.core_type<tc>, window_params = [{transform_indices = @transform_0, window_bounds = array<i64: 16, 16>}, {transform_indices = @transform_1, window_bounds = array<i64: 16, 32>}, {pipeline_mode = #tpu.pipeline_mode<synchronous>, transform_indices = @transform_2, window_bounds = array<i64: 16, 32>}, {pipeline_mode = #tpu.pipeline_mode<synchronous>, transform_indices = @transform_3, window_bounds = array<i64: 1, 32>}, {pipeline_mode = #tpu.pipeline_mode<synchronous>, transform_indices = @transform_4, window_bounds = array<i64: 32, 32>}, {pipeline_mode = #tpu.pipeline_mode<synchronous>, transform_indices = @transform_5, window_bounds = array<i64: 1, 32>}, {pipeline_mode = #tpu.pipeline_mode<synchronous>, transform_indices = @transform_6, window_bounds = array<i64: 32, 96>}, {pipeline_mode = #tpu.pipeline_mode<synchronous>, transform_indices = @transform_7, window_bounds = array<i64: 1, 96>}, {pipeline_mode = #tpu.pipeline_mode<synchronous>, transform_indices = @transform_8, window_bounds = array<i64: 32, 96>}, {pipeline_mode = #tpu.pipeline_mode<synchronous>, transform_indices = @transform_9, window_bounds = array<i64: 1, 96>}, {pipeline_mode = #tpu.pipeline_mode<synchronous>, transform_indices = @transform_10, window_bounds = array<i64: 32, 32>}, {pipeline_mode = #tpu.pipeline_mode<synchronous>, transform_indices = @transform_11, window_bounds = array<i64: 1, 32>}, {pipeline_mode = #tpu.pipeline_mode<synchronous>, transform_indices = @transform_12, window_bounds = array<i64: 32, 8>}, {pipeline_mode = #tpu.pipeline_mode<synchronous>, transform_indices = @transform_13, window_bounds = array<i64: 1, 8>}, {transform_indices = @transform_14, window_bounds = array<i64: 16, 8>}, {transform_indices = @transform_15, window_bounds = array<i64: 16, 32>}]} {
    %c0 = arith.constant 0 : index
    %c0_0 = arith.constant 0 : index
    %0 = vector.load %arg1[%c0, %c0_0] : memref<16x16xbf16, #tpu.memory_space<vmem>>, vector<16x16xbf16>
    %c0_1 = arith.constant 0 : index
    %c0_2 = arith.constant 0 : index
    %1 = vector.load %arg2[%c0_1, %c0_2] : memref<16x32xbf16, #tpu.memory_space<vmem>>, vector<16x32xbf16>
    %2 = arith.extf %1 : vector<16x32xbf16> to vector<16x32xf32>
    %c0_3 = arith.constant 0 : index
    %c0_4 = arith.constant 0 : index
    %3 = vector.load %arg3[%c0_3, %c0_4] : memref<16x32xbf16, #tpu.memory_space<vmem>>, vector<16x32xbf16>
    %cst = arith.constant dense<0.000000e+00> : vector<16x32xf32>
    %4 = tpu.matmul %0, %3, %cst {dimension_numbers = #tpu.dot_dimension_numbers<[1], [0], [0], [1], [0, 0, 1, 1], [], []>} : vector<16x16xbf16>, vector<16x32xbf16>, vector<16x32xf32> -> vector<16x32xf32>
    %c0_5 = arith.constant 0 : index
    %c0_6 = arith.constant 0 : index
    %5 = vector.load %arg4[%c0_5, %c0_6] : memref<1x32xf32, #tpu.memory_space<vmem>>, vector<1x32xf32>
    %6 = vector.broadcast %5 : vector<1x32xf32> to vector<16x32xf32>
    %7 = arith.addf %4, %6 : vector<16x32xf32>
    %cst_7 = arith.constant 0.000000e+00 : f32
    %8 = vector.broadcast %cst_7 : f32 to vector<16x32xf32>
    %9 = arith.maximumf %7, %8 : vector<16x32xf32>
    %10 = arith.truncf %9 : vector<16x32xf32> to vector<16x32xbf16>
    %c0_8 = arith.constant 0 : index
    %c0_9 = arith.constant 0 : index
    %11 = vector.load %arg5[%c0_8, %c0_9] : memref<32x32xbf16, #tpu.memory_space<vmem>>, vector<32x32xbf16>
    %cst_10 = arith.constant dense<0.000000e+00> : vector<16x32xf32>
    %12 = tpu.matmul %10, %11, %cst_10 {dimension_numbers = #tpu.dot_dimension_numbers<[1], [0], [0], [1], [0, 0, 1, 1], [], []>} : vector<16x32xbf16>, vector<32x32xbf16>, vector<16x32xf32> -> vector<16x32xf32>
    %c0_11 = arith.constant 0 : index
    %c0_12 = arith.constant 0 : index
    %13 = vector.load %arg6[%c0_11, %c0_12] : memref<1x32xf32, #tpu.memory_space<vmem>>, vector<1x32xf32>
    %14 = vector.broadcast %13 : vector<1x32xf32> to vector<16x32xf32>
    %15 = arith.addf %12, %14 : vector<16x32xf32>
    %cst_13 = arith.constant 0.000000e+00 : f32
    %16 = vector.broadcast %cst_13 : f32 to vector<16x32xf32>
    %17 = arith.maximumf %15, %16 : vector<16x32xf32>
    %18 = arith.truncf %17 : vector<16x32xf32> to vector<16x32xbf16>
    %c0_14 = arith.constant 0 : index
    %c0_15 = arith.constant 0 : index
    %19 = vector.load %arg7[%c0_14, %c0_15] : memref<32x96xbf16, #tpu.memory_space<vmem>>, vector<32x96xbf16>
    %cst_16 = arith.constant dense<0.000000e+00> : vector<16x96xf32>
    %20 = tpu.matmul %18, %19, %cst_16 {dimension_numbers = #tpu.dot_dimension_numbers<[1], [0], [0], [1], [0, 0, 1, 1], [], []>} : vector<16x32xbf16>, vector<32x96xbf16>, vector<16x96xf32> -> vector<16x96xf32>
    %c0_17 = arith.constant 0 : index
    %c0_18 = arith.constant 0 : index
    %21 = vector.load %arg8[%c0_17, %c0_18] : memref<1x96xf32, #tpu.memory_space<vmem>>, vector<1x96xf32>
    %22 = vector.broadcast %21 : vector<1x96xf32> to vector<16x96xf32>
    %23 = arith.addf %20, %22 : vector<16x96xf32>
    %c0_19 = arith.constant 0 : index
    %c0_20 = arith.constant 0 : index
    %24 = vector.load %arg9[%c0_19, %c0_20] : memref<32x96xbf16, #tpu.memory_space<vmem>>, vector<32x96xbf16>
    %cst_21 = arith.constant dense<0.000000e+00> : vector<16x96xf32>
    %25 = tpu.matmul %1, %24, %cst_21 {dimension_numbers = #tpu.dot_dimension_numbers<[1], [0], [0], [1], [0, 0, 1, 1], [], []>} : vector<16x32xbf16>, vector<32x96xbf16>, vector<16x96xf32> -> vector<16x96xf32>
    %c0_22 = arith.constant 0 : index
    %c0_23 = arith.constant 0 : index
    %26 = vector.load %arg10[%c0_22, %c0_23] : memref<1x96xf32, #tpu.memory_space<vmem>>, vector<1x96xf32>
    %27 = vector.broadcast %26 : vector<1x96xf32> to vector<16x96xf32>
    %28 = arith.addf %25, %27 : vector<16x96xf32>
    %29 = vector.extract_strided_slice %23 {offsets = [0, 0], sizes = [16, 32], strides = [1, 1]} : vector<16x96xf32> to vector<16x32xf32>
    %30 = vector.extract_strided_slice %28 {offsets = [0, 0], sizes = [16, 32], strides = [1, 1]} : vector<16x96xf32> to vector<16x32xf32>
    %31 = arith.addf %29, %30 : vector<16x32xf32>
    %32 = arith.negf %31 : vector<16x32xf32>
    %33 = math.exp %32 : vector<16x32xf32>
    %cst_24 = arith.constant 1.000000e+00 : f32
    %34 = vector.broadcast %cst_24 : f32 to vector<16x32xf32>
    %35 = arith.addf %34, %33 : vector<16x32xf32>
    %36 = arith.divf %34, %35 : vector<16x32xf32>
    %37 = vector.extract_strided_slice %23 {offsets = [0, 32], sizes = [16, 32], strides = [1, 1]} : vector<16x96xf32> to vector<16x32xf32>
    %38 = vector.extract_strided_slice %28 {offsets = [0, 32], sizes = [16, 32], strides = [1, 1]} : vector<16x96xf32> to vector<16x32xf32>
    %39 = arith.addf %37, %38 : vector<16x32xf32>
    %40 = arith.negf %39 : vector<16x32xf32>
    %41 = math.exp %40 : vector<16x32xf32>
    %cst_25 = arith.constant 1.000000e+00 : f32
    %42 = vector.broadcast %cst_25 : f32 to vector<16x32xf32>
    %43 = arith.addf %42, %41 : vector<16x32xf32>
    %44 = arith.divf %42, %43 : vector<16x32xf32>
    %45 = vector.extract_strided_slice %23 {offsets = [0, 64], sizes = [16, 32], strides = [1, 1]} : vector<16x96xf32> to vector<16x32xf32>
    %46 = vector.extract_strided_slice %28 {offsets = [0, 64], sizes = [16, 32], strides = [1, 1]} : vector<16x96xf32> to vector<16x32xf32>
    %47 = arith.mulf %36, %46 : vector<16x32xf32>
    %48 = arith.addf %45, %47 : vector<16x32xf32>
    %49 = math.tanh %48 : vector<16x32xf32>
    %cst_26 = arith.constant 1.000000e+00 : f32
    %50 = vector.broadcast %cst_26 : f32 to vector<16x32xf32>
    %51 = arith.subf %50, %44 : vector<16x32xf32>
    %52 = arith.mulf %51, %49 : vector<16x32xf32>
    %53 = arith.mulf %44, %2 : vector<16x32xf32>
    %54 = arith.addf %52, %53 : vector<16x32xf32>
    %55 = arith.truncf %54 : vector<16x32xf32> to vector<16x32xbf16>
    %c0_27 = arith.constant 0 : index
    %c0_28 = arith.constant 0 : index
    %56 = vector.load %arg16[%c0_27, %c0_28] : memref<16x32xbf16, #tpu.memory_space<vmem>>, vector<16x32xbf16>
    tpu.vector_store %arg16[%c0_27, %c0_28], %55 {strides = array<i32>} : memref<16x32xbf16, #tpu.memory_space<vmem>>, vector<16x32xbf16>,
    %57 = arith.truncf %54 : vector<16x32xf32> to vector<16x32xbf16>
    %c0_29 = arith.constant 0 : index
    %c0_30 = arith.constant 0 : index
    %58 = vector.load %arg11[%c0_29, %c0_30] : memref<32x32xbf16, #tpu.memory_space<vmem>>, vector<32x32xbf16>
    %cst_31 = arith.constant dense<0.000000e+00> : vector<16x32xf32>
    %59 = tpu.matmul %57, %58, %cst_31 {dimension_numbers = #tpu.dot_dimension_numbers<[1], [0], [0], [1], [0, 0, 1, 1], [], []>} : vector<16x32xbf16>, vector<32x32xbf16>, vector<16x32xf32> -> vector<16x32xf32>
    %c0_32 = arith.constant 0 : index
    %c0_33 = arith.constant 0 : index
    %60 = vector.load %arg12[%c0_32, %c0_33] : memref<1x32xf32, #tpu.memory_space<vmem>>, vector<1x32xf32>
    %61 = vector.broadcast %60 : vector<1x32xf32> to vector<16x32xf32>
    %62 = arith.addf %59, %61 : vector<16x32xf32>
    %cst_34 = arith.constant 0.000000e+00 : f32
    %63 = vector.broadcast %cst_34 : f32 to vector<16x32xf32>
    %64 = arith.maximumf %62, %63 : vector<16x32xf32>
    %65 = arith.truncf %64 : vector<16x32xf32> to vector<16x32xbf16>
    %c0_35 = arith.constant 0 : index
    %c0_36 = arith.constant 0 : index
    %66 = vector.load %arg13[%c0_35, %c0_36] : memref<32x8xbf16, #tpu.memory_space<vmem>>, vector<32x8xbf16>
    %cst_37 = arith.constant dense<0.000000e+00> : vector<16x8xf32>
    %67 = tpu.matmul %65, %66, %cst_37 {dimension_numbers = #tpu.dot_dimension_numbers<[1], [0], [0], [1], [0, 0, 1, 1], [], []>} : vector<16x32xbf16>, vector<32x8xbf16>, vector<16x8xf32> -> vector<16x8xf32>
    %c0_38 = arith.constant 0 : index
    %c0_39 = arith.constant 0 : index
    %68 = vector.load %arg14[%c0_38, %c0_39] : memref<1x8xf32, #tpu.memory_space<vmem>>, vector<1x8xf32>
    %69 = vector.broadcast %68 : vector<1x8xf32> to vector<16x8xf32>
    %70 = arith.addf %67, %69 : vector<16x8xf32>
    %71 = arith.truncf %70 : vector<16x8xf32> to vector<16x8xbf16>
    %c0_40 = arith.constant 0 : index
    %c0_41 = arith.constant 0 : index
    %72 = vector.load %arg15[%c0_40, %c0_41] : memref<16x8xbf16, #tpu.memory_space<vmem>>, vector<16x8xbf16>
    tpu.vector_store %arg15[%c0_40, %c0_41], %71 {strides = array<i32>} : memref<16x8xbf16, #tpu.memory_space<vmem>>, vector<16x8xbf16>,
    return
  }
  func.func @transform_0(%arg0: i32) -> (i32, i32) {
    %c0_i32 = arith.constant 0 : i32
    %c0_i32_0 = arith.constant 0 : i32
    return %arg0, %c0_i32 : i32, i32
  }
  func.func @transform_1(%arg0: i32) -> (i32, i32) {
    %c0_i32 = arith.constant 0 : i32
    %c0_i32_0 = arith.constant 0 : i32
    return %arg0, %c0_i32 : i32, i32
  }
  func.func @transform_2(%arg0: i32) -> (i32, i32) {
    %c0_i32 = arith.constant 0 : i32
    %c0_i32_0 = arith.constant 0 : i32
    %c0_i32_1 = arith.constant 0 : i32
    return %c0_i32, %c0_i32_0 : i32, i32
  }
  func.func @transform_3(%arg0: i32) -> (i32, i32) {
    %c0_i32 = arith.constant 0 : i32
    %c0_i32_0 = arith.constant 0 : i32
    %c0_i32_1 = arith.constant 0 : i32
    return %c0_i32, %c0_i32_0 : i32, i32
  }
  func.func @transform_4(%arg0: i32) -> (i32, i32) {
    %c0_i32 = arith.constant 0 : i32
    %c0_i32_0 = arith.constant 0 : i32
    %c0_i32_1 = arith.constant 0 : i32
    return %c0_i32, %c0_i32_0 : i32, i32
  }
  func.func @transform_5(%arg0: i32) -> (i32, i32) {
    %c0_i32 = arith.constant 0 : i32
    %c0_i32_0 = arith.constant 0 : i32
    %c0_i32_1 = arith.constant 0 : i32
    return %c0_i32, %c0_i32_0 : i32, i32
  }
  func.func @transform_6(%arg0: i32) -> (i32, i32) {
    %c0_i32 = arith.constant 0 : i32
    %c0_i32_0 = arith.constant 0 : i32
    %c0_i32_1 = arith.constant 0 : i32
    return %c0_i32, %c0_i32_0 : i32, i32
  }
  func.func @transform_7(%arg0: i32) -> (i32, i32) {
    %c0_i32 = arith.constant 0 : i32
    %c0_i32_0 = arith.constant 0 : i32
    %c0_i32_1 = arith.constant 0 : i32
    return %c0_i32, %c0_i32_0 : i32, i32
  }
  func.func @transform_8(%arg0: i32) -> (i32, i32) {
    %c0_i32 = arith.constant 0 : i32
    %c0_i32_0 = arith.constant 0 : i32
    %c0_i32_1 = arith.constant 0 : i32
    return %c0_i32, %c0_i32_0 : i32, i32
  }
  func.func @transform_9(%arg0: i32) -> (i32, i32) {
    %c0_i32 = arith.constant 0 : i32
    %c0_i32_0 = arith.constant 0 : i32
    %c0_i32_1 = arith.constant 0 : i32
    return %c0_i32, %c0_i32_0 : i32, i32
  }
  func.func @transform_10(%arg0: i32) -> (i32, i32) {
    %c0_i32 = arith.constant 0 : i32
    %c0_i32_0 = arith.constant 0 : i32
    %c0_i32_1 = arith.constant 0 : i32
    return %c0_i32, %c0_i32_0 : i32, i32
  }
  func.func @transform_11(%arg0: i32) -> (i32, i32) {
    %c0_i32 = arith.constant 0 : i32
    %c0_i32_0 = arith.constant 0 : i32
    %c0_i32_1 = arith.constant 0 : i32
    return %c0_i32, %c0_i32_0 : i32, i32
  }
  func.func @transform_12(%arg0: i32) -> (i32, i32) {
    %c0_i32 = arith.constant 0 : i32
    %c0_i32_0 = arith.constant 0 : i32
    %c0_i32_1 = arith.constant 0 : i32
    return %c0_i32, %c0_i32_0 : i32, i32
  }
  func.func @transform_13(%arg0: i32) -> (i32, i32) {
    %c0_i32 = arith.constant 0 : i32
    %c0_i32_0 = arith.constant 0 : i32
    %c0_i32_1 = arith.constant 0 : i32
    return %c0_i32, %c0_i32_0 : i32, i32
  }
  func.func @transform_14(%arg0: i32) -> (i32, i32) {
    %c0_i32 = arith.constant 0 : i32
    %c0_i32_0 = arith.constant 0 : i32
    return %arg0, %c0_i32 : i32, i32
  }
  func.func @transform_15(%arg0: i32) -> (i32, i32) {
    %c0_i32 = arith.constant 0 : i32
    %c0_i32_0 = arith.constant 0 : i32
    return %arg0, %c0_i32 : i32, i32
  }
}

</mosaic_0001>

<llo_original>
// kernel: madqn_forward.1
$region0: #{madqn_forward.1}
  #allocation0 [shape = 'u32[]', space=smem, size = 0x4, offset = 0x4, fixed_abs, tag = 'smem constant byte address 0x4 - core index']
  #allocation1 [shape = 'u32[144,128]{1,0:T(1,128)}', space=vmem, size = 0x12000, scoped, tag = 'internal scratch']
  %s0 = inlined_call_operand.vmem [shape: bf16[16,16], index: 0, kind: input, shape index: {}]
  %s1 = inlined_call_operand.vmem [shape: bf16[16,32], index: 1, kind: input, shape index: {}]
  %s2 = inlined_call_operand.vmem [shape: bf16[16,32], index: 2, kind: input, shape index: {}]
  %s3 = inlined_call_operand.vmem [shape: f32[1,32], index: 3, kind: input, shape index: {}]
  %s4 = inlined_call_operand.vmem [shape: bf16[32,32], index: 4, kind: input, shape index: {}]
  %s5 = inlined_call_operand.vmem [shape: f32[1,32], index: 5, kind: input, shape index: {}]
  %s6 = inlined_call_operand.vmem [shape: bf16[32,96], index: 6, kind: input, shape index: {}]
  %s7 = inlined_call_operand.vmem [shape: f32[1,96], index: 7, kind: input, shape index: {}]
  %s8 = inlined_call_operand.vmem [shape: bf16[32,96], index: 8, kind: input, shape index: {}]
  %s9 = inlined_call_operand.vmem [shape: f32[1,96], index: 9, kind: input, shape index: {}]
  %s10 = inlined_call_operand.vmem [shape: bf16[32,32], index: 10, kind: input, shape index: {}]
  %s11 = inlined_call_operand.vmem [shape: f32[1,32], index: 11, kind: input, shape index: {}]
  %s12 = inlined_call_operand.vmem [shape: bf16[32,8], index: 12, kind: input, shape index: {}]
  %s13 = inlined_call_operand.vmem [shape: f32[1,8], index: 13, kind: input, shape index: {}]
  %s14 = inlined_call_operand.vmem [shape: bf16[16,8], index: 14, kind: output, shape index: {0}]
  %s15 = inlined_call_operand.vmem [shape: bf16[16,32], index: 15, kind: output, shape index: {1}]
  %16 = xla_tuple %s14, %s15
  %s17 = sld [smem:[#allocation0]]
  $region74: #{madqn_forward.1} parent=0
    _
  %s19 = ssub.s32 1, %s17
  %s20 = scalar_select 0, %s19, %s17
  // Predicated region
  $region2: #{madqn_forward.1} parent=0 // pred_check
    _
  $region3: #{madqn_forward.1} parent=0 // pred_check_branch
    %22 = sbr.rel (0) target = $region5
  $region4: #{madqn_forward.1} parent=0 // pred_region
    _
  $region5: #{madqn_forward.1} parent=0 // pred_fallthru
    _
  // Predicated region
  $region6: #{madqn_forward.1} parent=0 // pred_check
    _
  $region7: #{madqn_forward.1} parent=0 // pred_check_branch
    %24 = sbr.rel (0) target = $region9
  $region8: #{madqn_forward.1} parent=0 // pred_region
    _
  $region9: #{madqn_forward.1} parent=0 // pred_fallthru
    _
  // Predicated region
  $region10: #{madqn_forward.1} parent=0 // pred_check
    _
  $region11: #{madqn_forward.1} parent=0 // pred_check_branch
    %26 = sbr.rel (0) target = $region13
  $region12: #{madqn_forward.1} parent=0 // pred_region
    _
  $region13: #{madqn_forward.1} parent=0 // pred_fallthru
    _
  // Predicated region
  $region14: #{madqn_forward.1} parent=0 // pred_check
    _
  $region15: #{madqn_forward.1} parent=0 // pred_check_branch
    %28 = sbr.rel (0) target = $region17
  $region16: #{madqn_forward.1} parent=0 // pred_region
    _
  $region17: #{madqn_forward.1} parent=0 // pred_fallthru
    _
  // Predicated region
  $region18: #{madqn_forward.1} parent=0 // pred_check
    _
  $region19: #{madqn_forward.1} parent=0 // pred_check_branch
    %30 = sbr.rel (0) target = $region21
  $region20: #{madqn_forward.1} parent=0 // pred_region
    _
  $region21: #{madqn_forward.1} parent=0 // pred_fallthru
    _
  // Predicated region
  $region22: #{madqn_forward.1} parent=0 // pred_check
    _
  $region23: #{madqn_forward.1} parent=0 // pred_check_branch
    %32 = sbr.rel (0) target = $region25
  $region24: #{madqn_forward.1} parent=0 // pred_region
    _
  $region25: #{madqn_forward.1} parent=0 // pred_fallthru
    _
  // Predicated region
  $region26: #{madqn_forward.1} parent=0 // pred_check
    _
  $region27: #{madqn_forward.1} parent=0 // pred_check_branch
    %34 = sbr.rel (0) target = $region29
  $region28: #{madqn_forward.1} parent=0 // pred_region
    _
  $region29: #{madqn_forward.1} parent=0 // pred_fallthru
    _
  // Predicated region
  $region30: #{madqn_forward.1} parent=0 // pred_check
    _
  $region31: #{madqn_forward.1} parent=0 // pred_check_branch
    %36 = sbr.rel (0) target = $region33
  $region32: #{madqn_forward.1} parent=0 // pred_region
    _
  $region33: #{madqn_forward.1} parent=0 // pred_fallthru
    _
  // Predicated region
  $region34: #{madqn_forward.1} parent=0 // pred_check
    _
  $region35: #{madqn_forward.1} parent=0 // pred_check_branch
    %38 = sbr.rel (0) target = $region37
  $region36: #{madqn_forward.1} parent=0 // pred_region
    _
  $region37: #{madqn_forward.1} parent=0 // pred_fallthru
    _
  // Predicated region
  $region38: #{madqn_forward.1} parent=0 // pred_check
    _
  $region39: #{madqn_forward.1} parent=0 // pred_check_branch
    %40 = sbr.rel (0) target = $region41
  $region40: #{madqn_forward.1} parent=0 // pred_region
    _
  $region41: #{madqn_forward.1} parent=0 // pred_fallthru
    _
  // Predicated region
  $region42: #{madqn_forward.1} parent=0 // pred_check
    _
  $region43: #{madqn_forward.1} parent=0 // pred_check_branch
    %42 = sbr.rel (0) target = $region45
  $region44: #{madqn_forward.1} parent=0 // pred_region
    _
  $region45: #{madqn_forward.1} parent=0 // pred_fallthru
    _
  // Predicated region
  $region46: #{madqn_forward.1} parent=0 // pred_check
    _
  $region47: #{madqn_forward.1} parent=0 // pred_check_branch
    %44 = sbr.rel (0) target = $region49
  $region48: #{madqn_forward.1} parent=0 // pred_region
    _
  $region49: #{madqn_forward.1} parent=0 // pred_fallthru
    _
  // Predicated region
  $region50: #{madqn_forward.1} parent=0 // pred_check
    _
  $region51: #{madqn_forward.1} parent=0 // pred_check_branch
    %46 = sbr.rel (0) target = $region53
  $region52: #{madqn_forward.1} parent=0 // pred_region
    _
  $region53: #{madqn_forward.1} parent=0 // pred_fallthru
    _
  // Predicated region
  $region54: #{madqn_forward.1} parent=0 // pred_check
    _
  $region55: #{madqn_forward.1} parent=0 // pred_check_branch
    %48 = sbr.rel (0) target = $region57
  $region56: #{madqn_forward.1} parent=0 // pred_region
    _
  $region57: #{madqn_forward.1} parent=0 // pred_fallthru
    _
  %v50 = vld [vmem:[%s0] sm:$0xf]
  %v51 = vld [vmem:[%s0 + $0x4] sm:$0xf]
  %v52 = vld [vmem:[%s1] sm:$0xf]
  %v53 = vld [vmem:[%s1 + $0x4] sm:$0xf]
  %v54 = vunpack.c.l.bf16 %v52
  %v55 = vunpack.c.l.bf16 %v53
  %v56 = vld [vmem:[%s2] sm:$0xf]
  %v57 = vld [vmem:[%s2 + $0x4] sm:$0xf]
  %v58 = vld [vmem:[%s3] sm:$0x1]
  %v60 = vlaneseq
  %v61 = vshrl.u32 %v60, 7
  %v62 = vsub.s32 0, %v61
  %v63 = vrot.slane %v58, %v62
  %v67 = vunpack.c.l.b16 %v50
  %v68 = vunpack.c.l.b16 %v51
  %v69 = vpack.c.b16 %v68, %v67
  %v72 = vunpack.c.l.b16 %v56
  %v73 = vunpack.c.l.b16 %v57
  %v74 = vpack.c.b16 %v73, %v72
  %vm76 = vcmask 130048
  %v78 = vsel %vm76, %v69, 0
  %80 = vmatprep.subr.bf16.mxu0 0
  %81 = vmatpush1.bf16.msra.mxu0 %v74
  %82 = vmatprep.subr.bf16.mxu0 0
  %83 = vmatpush1.bf16.msra.mxu0 0
  %84 = vmatprep.subr.bf16.mxu0 0
  %85 = vmatpush1.bf16.msra.mxu0 0
  %86 = vmatprep.subr.bf16.mxu0 0
  %87 = vmatpush1.bf16.msra.mxu0 0
  %88 = vmatprep.subr.bf16.mxu0 0
  %89 = vmatpush1.bf16.msra.mxu0 0
  %90 = vmatprep.subr.bf16.mxu0 0
  %91 = vmatpush1.bf16.msra.mxu0 0
  %92 = vmatprep.subr.bf16.mxu0 0
  %93 = vmatpush1.bf16.msra.mxu0 0
  %94 = vmatprep.subr.bf16.mxu0 0
  %95 = vmatpush1.bf16.msra.mxu0 0
  %96 = vmatprep.subr.bf16.mxu0 0
  %97 = vmatpush1.bf16.msra.mxu0 0
  %98 = vmatprep.subr.bf16.mxu0 0
  %99 = vmatpush1.bf16.msra.mxu0 0
  %100 = vmatprep.subr.bf16.mxu0 0
  %101 = vmatpush1.bf16.msra.mxu0 0
  %102 = vmatprep.subr.bf16.mxu0 0
  %103 = vmatpush1.bf16.msra.mxu0 0
  %104 = vmatprep.subr.bf16.mxu0 0
  %105 = vmatpush1.bf16.msra.mxu0 0
  %106 = vmatprep.subr.bf16.mxu0 0
  %107 = vmatpush1.bf16.msra.mxu0 0
  %108 = vmatprep.subr.bf16.mxu0 0
  %109 = vmatpush1.bf16.msra.mxu0 0
  %110 = vmatprep.subr.bf16.mxu0 0
  %111 = vmatpush1.bf16.msra.mxu0 0
  %112 = vmatprep.mubr.bf16.mxu0 0
  %113 = vmatmul.mubr.bf16.gmra.mrb[0].mxu0 %v78
  %v114 = vpop.f32.mrb[0].mxu0
  %v115 = vadd.f32 %v63, %v114
  %v116 = vpop.f32.mrb[0].mxu0
  %v117 = vpop.f32.mrb[0].mxu0
  %v118 = vadd.f32 %v63, %v117
  %v119 = vpop.f32.mrb[0].mxu0
  %120 = vdwg.mxu0
  %v121 = vmax.f32 %v115, 0.0
  %v122 = vmax.f32 %v118, 0.0
  %v123 = vpack.c.bf16 %v122, %v121
  %v124 = vld [vmem:[%s4] sm:$0xf]
  %v125 = vld [vmem:[%s4 + $0x4] sm:$0xf]
  %v126 = vld [vmem:[%s4 + $0x8] sm:$0xf]
  %v127 = vld [vmem:[%s4 + $0xc] sm:$0xf]
  %v128 = vld [vmem:[%s5] sm:$0x1]
  %v130 = vlaneseq
  %v131 = vshrl.u32 %v130, 7
  %v132 = vsub.s32 0, %v131
  %v133 = vrot.slane %v128, %v132
  %v139 = vunpack.c.l.b16 %v124
  %v140 = vunpack.c.l.b16 %v125
  %v141 = vunpack.c.l.b16 %v126
  %v142 = vunpack.c.l.b16 %v127
  %v143 = vpack.c.b16 %v140, %v139
  %v144 = vpack.c.b16 %v142, %v141
  %vm147 = vcmask 261120
  %v149 = vsel %vm147, %v123, 0
  %151 = vmatprep.subr.bf16.mxu0 0
  %152 = vmatpush1.bf16.msra.mxu0 %v143
  %153 = vmatprep.subr.bf16.mxu0 0
  %154 = vmatpush1.bf16.msra.mxu0 %v144
  %155 = vmatprep.subr.bf16.mxu0 0
  %156 = vmatpush1.bf16.msra.mxu0 0
  %157 = vmatprep.subr.bf16.mxu0 0
  %158 = vmatpush1.bf16.msra.mxu0 0
  %159 = vmatprep.subr.bf16.mxu0 0
  %160 = vmatpush1.bf16.msra.mxu0 0
  %161 = vmatprep.subr.bf16.mxu0 0
  %162 = vmatpush1.bf16.msra.mxu0 0
  %163 = vmatprep.subr.bf16.mxu0 0
  %164 = vmatpush1.bf16.msra.mxu0 0
  %165 = vmatprep.subr.bf16.mxu0 0
  %166 = vmatpush1.bf16.msra.mxu0 0
  %167 = vmatprep.subr.bf16.mxu0 0
  %168 = vmatpush1.bf16.msra.mxu0 0
  %169 = vmatprep.subr.bf16.mxu0 0
  %170 = vmatpush1.bf16.msra.mxu0 0
  %171 = vmatprep.subr.bf16.mxu0 0
  %172 = vmatpush1.bf16.msra.mxu0 0
  %173 = vmatprep.subr.bf16.mxu0 0
  %174 = vmatpush1.bf16.msra.mxu0 0
  %175 = vmatprep.subr.bf16.mxu0 0
  %176 = vmatpush1.bf16.msra.mxu0 0
  %177 = vmatprep.subr.bf16.mxu0 0
  %178 = vmatpush1.bf16.msra.mxu0 0
  %179 = vmatprep.subr.bf16.mxu0 0
  %180 = vmatpush1.bf16.msra.mxu0 0
  %181 = vmatprep.subr.bf16.mxu0 0
  %182 = vmatpush1.bf16.msra.mxu0 0
  %183 = vmatprep.mubr.bf16.mxu0 0
  %184 = vmatmul.mubr.bf16.gmra.mrb[0].mxu0 %v149
  %v185 = vpop.f32.mrb[0].mxu0
  %v186 = vadd.f32 %v133, %v185
  %v187 = vpop.f32.mrb[0].mxu0
  %v188 = vpop.f32.mrb[0].mxu0
  %v189 = vadd.f32 %v133, %v188
  %v190 = vpop.f32.mrb[0].mxu0
  %191 = vdwg.mxu0
  %v192 = vmax.f32 %v186, 0.0
  %v193 = vmax.f32 %v189, 0.0
  %v194 = vpack.c.bf16 %v193, %v192
  %v195 = vld [vmem:[%s6] sm:$0xf]
  %v196 = vld [vmem:[%s6 + $0x4] sm:$0xf]
  %v197 = vld [vmem:[%s6 + $0x8] sm:$0xf]
  %v198 = vld [vmem:[%s6 + $0xc] sm:$0xf]
  %v199 = vld [vmem:[%s7] sm:$0x1]
  %v201 = vlaneseq
  %v202 = vshrl.u32 %v201, 7
  %v203 = vsub.s32 0, %v202
  %v204 = vrot.slane %v199, %v203
  %v210 = vunpack.c.l.b16 %v195
  %v211 = vunpack.c.l.b16 %v196
  %v212 = vunpack.c.l.b16 %v197
  %v213 = vunpack.c.l.b16 %v198
  %v214 = vpack.c.b16 %v211, %v210
  %v215 = vpack.c.b16 %v213, %v212
  %v219 = vsel %vm147, %v194, 0
  %221 = vmatprep.subr.bf16.mxu0 0
  %222 = vmatpush1.bf16.msra.mxu0 %v214
  %223 = vmatprep.subr.bf16.mxu0 0
  %224 = vmatpush1.bf16.msra.mxu0 %v215
  %225 = vmatprep.subr.bf16.mxu0 0
  %226 = vmatpush1.bf16.msra.mxu0 0
  %227 = vmatprep.subr.bf16.mxu0 0
  %228 = vmatpush1.bf16.msra.mxu0 0
  %229 = vmatprep.subr.bf16.mxu0 0
  %230 = vmatpush1.bf16.msra.mxu0 0
  %231 = vmatprep.subr.bf16.mxu0 0
  %232 = vmatpush1.bf16.msra.mxu0 0
  %233 = vmatprep.subr.bf16.mxu0 0
  %234 = vmatpush1.bf16.msra.mxu0 0
  %235 = vmatprep.subr.bf16.mxu0 0
  %236 = vmatpush1.bf16.msra.mxu0 0
  %237 = vmatprep.subr.bf16.mxu0 0
  %238 = vmatpush1.bf16.msra.mxu0 0
  %239 = vmatprep.subr.bf16.mxu0 0
  %240 = vmatpush1.bf16.msra.mxu0 0
  %241 = vmatprep.subr.bf16.mxu0 0
  %242 = vmatpush1.bf16.msra.mxu0 0
  %243 = vmatprep.subr.bf16.mxu0 0
  %244 = vmatpush1.bf16.msra.mxu0 0
  %245 = vmatprep.subr.bf16.mxu0 0
  %246 = vmatpush1.bf16.msra.mxu0 0
  %247 = vmatprep.subr.bf16.mxu0 0
  %248 = vmatpush1.bf16.msra.mxu0 0
  %249 = vmatprep.subr.bf16.mxu0 0
  %250 = vmatpush1.bf16.msra.mxu0 0
  %251 = vmatprep.subr.bf16.mxu0 0
  %252 = vmatpush1.bf16.msra.mxu0 0
  %253 = vmatprep.mubr.bf16.mxu0 0
  %254 = vmatmul.mubr.bf16.gmra.mrb[0].mxu0 %v219
  %v255 = vpop.f32.mrb[0].mxu0
  %v256 = vadd.f32 %v204, %v255
  %v257 = vpop.f32.mrb[0].mxu0
  %v258 = vpop.f32.mrb[0].mxu0
  %v259 = vadd.f32 %v204, %v258
  %v260 = vpop.f32.mrb[0].mxu0
  %261 = vdwg.mxu0
  %v262 = vld [vmem:[%s8] sm:$0xf]
  %v263 = vld [vmem:[%s8 + $0x4] sm:$0xf]
  %v264 = vld [vmem:[%s8 + $0x8] sm:$0xf]
  %v265 = vld [vmem:[%s8 + $0xc] sm:$0xf]
  %v266 = vld [vmem:[%s9] sm:$0x1]
  %v268 = vlaneseq
  %v269 = vshrl.u32 %v268, 7
  %v270 = vsub.s32 0, %v269
  %v271 = vrot.slane %v266, %v270
  %v275 = vunpack.c.l.b16 %v52
  %v276 = vunpack.c.l.b16 %v53
  %v277 = vpack.c.b16 %v276, %v275
  %v282 = vunpack.c.l.b16 %v262
  %v283 = vunpack.c.l.b16 %v263
  %v284 = vunpack.c.l.b16 %v264
  %v285 = vunpack.c.l.b16 %v265
  %v286 = vpack.c.b16 %v283, %v282
  %v287 = vpack.c.b16 %v285, %v284
  %v291 = vsel %vm147, %v277, 0
  %293 = vmatprep.subr.bf16.mxu0 0
  %294 = vmatpush1.bf16.msra.mxu0 %v286
  %295 = vmatprep.subr.bf16.mxu0 0
  %296 = vmatpush1.bf16.msra.mxu0 %v287
  %297 = vmatprep.subr.bf16.mxu0 0
  %298 = vmatpush1.bf16.msra.mxu0 0
  %299 = vmatprep.subr.bf16.mxu0 0
  %300 = vmatpush1.bf16.msra.mxu0 0
  %301 = vmatprep.subr.bf16.mxu0 0
  %302 = vmatpush1.bf16.msra.mxu0 0
  %303 = vmatprep.subr.bf16.mxu0 0
  %304 = vmatpush1.bf16.msra.mxu0 0
  %305 = vmatprep.subr.bf16.mxu0 0
  %306 = vmatpush1.bf16.msra.mxu0 0
  %307 = vmatprep.subr.bf16.mxu0 0
  %308 = vmatpush1.bf16.msra.mxu0 0
  %309 = vmatprep.subr.bf16.mxu0 0
  %310 = vmatpush1.bf16.msra.mxu0 0
  %311 = vmatprep.subr.bf16.mxu0 0
  %312 = vmatpush1.bf16.msra.mxu0 0
  %313 = vmatprep.subr.bf16.mxu0 0
  %314 = vmatpush1.bf16.msra.mxu0 0
  %315 = vmatprep.subr.bf16.mxu0 0
  %316 = vmatpush1.bf16.msra.mxu0 0
  %317 = vmatprep.subr.bf16.mxu0 0
  %318 = vmatpush1.bf16.msra.mxu0 0
  %319 = vmatprep.subr.bf16.mxu0 0
  %320 = vmatpush1.bf16.msra.mxu0 0
  %321 = vmatprep.subr.bf16.mxu0 0
  %322 = vmatpush1.bf16.msra.mxu0 0
  %323 = vmatprep.subr.bf16.mxu0 0
  %324 = vmatpush1.bf16.msra.mxu0 0
  %325 = vmatprep.mubr.bf16.mxu0 0
  %326 = vmatmul.mubr.bf16.gmra.mrb[0].mxu0 %v291
  %v327 = vpop.f32.mrb[0].mxu0
  %v328 = vadd.f32 %v271, %v327
  %v329 = vpop.f32.mrb[0].mxu0
  %v330 = vpop.f32.mrb[0].mxu0
  %v331 = vadd.f32 %v271, %v330
  %v332 = vpop.f32.mrb[0].mxu0
  %333 = vdwg.mxu0
  %v334 = vadd.f32 %v256, %v328
  %v335 = vadd.f32 %v259, %v331
  %v336 = vxor.u32 %v334, 2147483648
  %v337 = vxor.u32 %v335, 2147483648
  %v338 = vmul.f32 %v336, 1.442695
  %v339 = vpow.pop %v338
  %v340 = vmul.f32 %v337, 1.442695
  %v341 = vpow.pop %v340
  %v342 = vadd.f32 %v339, 1.0
  %v343 = vadd.f32 %v341, 1.0
  %v344 = vrcp.pop %v342
  %v345 = vmul.f32 1.0, %v344
  %v346 = vrcp.pop %v343
  %v347 = vmul.f32 1.0, %v346
  %350 = vrot.lane.b32.xlu0 %v328, 64
  %v351 = vpop.permute.xlu0 %350
  %352 = vrot.lane.b32.xlu0 %v331, 64
  %v353 = vpop.permute.xlu0 %352
  %v356 = vmul.f32 %v345, %v351
  %v357 = vmul.f32 %v347, %v353
  %360 = vrot.lane.b32.xlu0 %v356, 64
  %v361 = vpop.permute.xlu0 %360
  %362 = vrot.lane.b32.xlu0 %v357, 64
  %v363 = vpop.permute.xlu0 %362
  %v366 = vadd.f32 %v256, %v361
  %v367 = vadd.f32 %v259, %v363
  %v368 = vtanh.pop %v366
  %v369 = vtanh.pop %v367
  %v370 = vsub.f32 1.0, %v345
  %v371 = vsub.f32 1.0, %v347
  %374 = vrot.lane.b32.xlu0 %v368, 96
  %v375 = vpop.permute.xlu0 %374
  %376 = vrot.lane.b32.xlu0 %v369, 96
  %v377 = vpop.permute.xlu0 %376
  %v380 = vmul.f32 %v370, %v375
  %v381 = vmul.f32 %v371, %v377
  %384 = vrot.lane.b32.xlu0 %v54, 32
  %v385 = vpop.permute.xlu0 %384
  %386 = vrot.lane.b32.xlu0 %v55, 32
  %v387 = vpop.permute.xlu0 %386
  %v390 = vmul.f32 %v345, %v385
  %v391 = vmul.f32 %v347, %v387
  %v392 = vadd.f32 %v380, %v390
  %v393 = vadd.f32 %v381, %v391
  %v394 = vpack.c.bf16 %v393, %v392
  %v396 = vunpack.c.l.b16 %v394
  %v397 = vunpack.c.h.b16 %v394
  %v398 = vpack.c.b16 %v396, %v396
  %v399 = vpack.c.b16 %v397, %v397
  %400 = vrot.lane.b32.xlu0 %v398, 96
  %v401 = vpop.permute.xlu0 %400
  %402 = vrot.lane.b32.xlu0 %v399, 96
  %v403 = vpop.permute.xlu0 %402
  %vm406 = vcmask 257024
  %407 = vst.msk [vmem:[%s15] sm:$0xf] %vm406, %v401
  %408 = vst.msk [vmem:[%s15 + $0x4] sm:$0xf] %vm406, %v403
  %v409 = vld [vmem:[%s10] sm:$0xf]
  %v410 = vld [vmem:[%s10 + $0x4] sm:$0xf]
  %v411 = vld [vmem:[%s10 + $0x8] sm:$0xf]
  %v412 = vld [vmem:[%s10 + $0xc] sm:$0xf]
  %v413 = vld [vmem:[%s11] sm:$0x1]
  %v415 = vlaneseq
  %v416 = vshrl.u32 %v415, 7
  %v417 = vsub.s32 0, %v416
  %v418 = vrot.slane %v413, %v417
  %420 = vrot.lane.b32.xlu0 %v394, 96
  %v421 = vpop.permute.xlu0 %420
  %v426 = vunpack.c.l.b16 %v409
  %v427 = vunpack.c.l.b16 %v410
  %v428 = vunpack.c.l.b16 %v411
  %v429 = vunpack.c.l.b16 %v412
  %v430 = vpack.c.b16 %v427, %v426
  %v431 = vpack.c.b16 %v429, %v428
  %v435 = vsel %vm147, %v421, 0
  %437 = vmatprep.subr.bf16.mxu0 0
  %438 = vmatpush1.bf16.msra.mxu0 %v430
  %439 = vmatprep.subr.bf16.mxu0 0
  %440 = vmatpush1.bf16.msra.mxu0 %v431
  %441 = vmatprep.subr.bf16.mxu0 0
  %442 = vmatpush1.bf16.msra.mxu0 0
  %443 = vmatprep.subr.bf16.mxu0 0
  %444 = vmatpush1.bf16.msra.mxu0 0
  %445 = vmatprep.subr.bf16.mxu0 0
  %446 = vmatpush1.bf16.msra.mxu0 0
  %447 = vmatprep.subr.bf16.mxu0 0
  %448 = vmatpush1.bf16.msra.mxu0 0
  %449 = vmatprep.subr.bf16.mxu0 0
  %450 = vmatpush1.bf16.msra.mxu0 0
  %451 = vmatprep.subr.bf16.mxu0 0
  %452 = vmatpush1.bf16.msra.mxu0 0
  %453 = vmatprep.subr.bf16.mxu0 0
  %454 = vmatpush1.bf16.msra.mxu0 0
  %455 = vmatprep.subr.bf16.mxu0 0
  %456 = vmatpush1.bf16.msra.mxu0 0
  %457 = vmatprep.subr.bf16.mxu0 0
  %458 = vmatpush1.bf16.msra.mxu0 0
  %459 = vmatprep.subr.bf16.mxu0 0
  %460 = vmatpush1.bf16.msra.mxu0 0
  %461 = vmatprep.subr.bf16.mxu0 0
  %462 = vmatpush1.bf16.msra.mxu0 0
  %463 = vmatprep.subr.bf16.mxu0 0
  %464 = vmatpush1.bf16.msra.mxu0 0
  %465 = vmatprep.subr.bf16.mxu0 0
  %466 = vmatpush1.bf16.msra.mxu0 0
  %467 = vmatprep.subr.bf16.mxu0 0
  %468 = vmatpush1.bf16.msra.mxu0 0
  %469 = vmatprep.mubr.bf16.mxu0 0
  %470 = vmatmul.mubr.bf16.gmra.mrb[0].mxu0 %v435
  %v471 = vpop.f32.mrb[0].mxu0
  %v472 = vadd.f32 %v418, %v471
  %v473 = vpop.f32.mrb[0].mxu0
  %v474 = vpop.f32.mrb[0].mxu0
  %v475 = vadd.f32 %v418, %v474
  %v476 = vpop.f32.mrb[0].mxu0
  %477 = vdwg.mxu0
  %v478 = vmax.f32 %v472, 0.0
  %v479 = vmax.f32 %v475, 0.0
  %v480 = vpack.c.bf16 %v479, %v478
  %v481 = vld [vmem:[%s12] sm:$0xf]
  %v482 = vld [vmem:[%s12 + $0x4] sm:$0xf]
  %v483 = vld [vmem:[%s12 + $0x8] sm:$0xf]
  %v484 = vld [vmem:[%s12 + $0xc] sm:$0xf]
  %v485 = vld [vmem:[%s13] sm:$0x1]
  %v487 = vlaneseq
  %v488 = vshrl.u32 %v487, 7
  %v489 = vsub.s32 0, %v488
  %v490 = vrot.slane %v485, %v489
  %v496 = vunpack.c.l.b16 %v481
  %v497 = vunpack.c.l.b16 %v482
  %v498 = vunpack.c.l.b16 %v483
  %v499 = vunpack.c.l.b16 %v484
  %v500 = vpack.c.b16 %v497, %v496
  %v501 = vpack.c.b16 %v499, %v498
  %v505 = vsel %vm147, %v480, 0
  %507 = vmatprep.subr.bf16.mxu0 0
  %508 = vmatpush1.bf16.msra.mxu0 %v500
  %509 = vmatprep.subr.bf16.mxu0 0
  %510 = vmatpush1.bf16.msra.mxu0 %v501
  %511 = vmatprep.subr.bf16.mxu0 0
  %512 = vmatpush1.bf16.msra.mxu0 0
  %513 = vmatprep.subr.bf16.mxu0 0
  %514 = vmatpush1.bf16.msra.mxu0 0
  %515 = vmatprep.subr.bf16.mxu0 0
  %516 = vmatpush1.bf16.msra.mxu0 0
  %517 = vmatprep.subr.bf16.mxu0 0
  %518 = vmatpush1.bf16.msra.mxu0 0
  %519 = vmatprep.subr.bf16.mxu0 0
  %520 = vmatpush1.bf16.msra.mxu0 0
  %521 = vmatprep.subr.bf16.mxu0 0
  %522 = vmatpush1.bf16.msra.mxu0 0
  %523 = vmatprep.subr.bf16.mxu0 0
  %524 = vmatpush1.bf16.msra.mxu0 0
  %525 = vmatprep.subr.bf16.mxu0 0
  %526 = vmatpush1.bf16.msra.mxu0 0
  %527 = vmatprep.subr.bf16.mxu0 0
  %528 = vmatpush1.bf16.msra.mxu0 0
  %529 = vmatprep.subr.bf16.mxu0 0
  %530 = vmatpush1.bf16.msra.mxu0 0
  %531 = vmatprep.subr.bf16.mxu0 0
  %532 = vmatpush1.bf16.msra.mxu0 0
  %533 = vmatprep.subr.bf16.mxu0 0
  %534 = vmatpush1.bf16.msra.mxu0 0
  %535 = vmatprep.subr.bf16.mxu0 0
  %536 = vmatpush1.bf16.msra.mxu0 0
  %537 = vmatprep.subr.bf16.mxu0 0
  %538 = vmatpush1.bf16.msra.mxu0 0
  %539 = vmatprep.mubr.bf16.mxu0 0
  %540 = vmatmul.mubr.bf16.gmra.mrb[0].mxu0 %v505
  %v541 = vpop.f32.mrb[0].mxu0
  %v542 = vadd.f32 %v490, %v541
  %v543 = vpop.f32.mrb[0].mxu0
  %v544 = vpop.f32.mrb[0].mxu0
  %v545 = vadd.f32 %v490, %v544
  %v546 = vpop.f32.mrb[0].mxu0
  %547 = vdwg.mxu0
  %v548 = vpack.c.bf16 %v545, %v542
  %v550 = vunpack.c.l.b16 %v548
  %v551 = vunpack.c.h.b16 %v548
  %v552 = vpack.c.b16 %v550, %v550
  %v553 = vpack.c.b16 %v551, %v551
  %vm556 = vcmask 60416
  %557 = vst.msk [vmem:[%s14] sm:$0xf] %vm556, %v552
  %558 = vst.msk [vmem:[%s14 + $0x4] sm:$0xf] %vm556, %v553
  // Predicated region
  $region58: #{madqn_forward.1} parent=0 // pred_check
    _
  $region59: #{madqn_forward.1} parent=0 // pred_check_branch
    %560 = sbr.rel (0) target = $region61
  $region60: #{madqn_forward.1} parent=0 // pred_region
    _
  $region61: #{madqn_forward.1} parent=0 // pred_fallthru
    _
  // Predicated region
  $region62: #{madqn_forward.1} parent=0 // pred_check
    _
  $region63: #{madqn_forward.1} parent=0 // pred_check_branch
    %562 = sbr.rel (0) target = $region65
  $region64: #{madqn_forward.1} parent=0 // pred_region
    _
  $region65: #{madqn_forward.1} parent=0 // pred_fallthru
    _
  // Predicated region
  $region66: #{madqn_forward.1} parent=0 // pred_check
    _
  $region67: #{madqn_forward.1} parent=0 // pred_check_branch
    %564 = sbr.rel (0) target = $region69
  $region68: #{madqn_forward.1} parent=0 // pred_region
    _
  $region69: #{madqn_forward.1} parent=0 // pred_fallthru
    _
  // Predicated region
  $region70: #{madqn_forward.1} parent=0 // pred_check
    _
  $region71: #{madqn_forward.1} parent=0 // pred_check_branch
    %566 = sbr.rel (0) target = $region73
  $region72: #{madqn_forward.1} parent=0 // pred_region
    _
  $region73: #{madqn_forward.1} parent=0 // pred_fallthru
    _

</llo_original>
